<compile_context>
chip_gen: v7x
topology: tpu7x:2x2x1
jax: 0.10.0
libtpu: 0.0.40
codegen_flags: <defaults>
</compile_context>

<pallas_src>
import functools

import jax
import jax.numpy as jnp
from jax.experimental import pallas as pl
from jax.experimental.pallas import tpu as pltpu


# Weights smaller than this (bytes) skip Pallas entirely: per-launch / per-step overhead
# dominates for sub-vreg-sized tensors.
_PALLAS_MIN_BYTES = 128 * 1024
# Target per-block VMEM footprint.  ~1 MiB keeps (in + out) x double-buffering well under
# the 16 MiB scoped-VMEM default on v5e while still reaching ~85% of the HBM roofline.
_TARGET_BLOCK_BYTES = 1 << 20


def _binary_kernel(x_ref, o_ref):
    # W == 2: meancenter/clamp in the reference are non-inplace + discarded (no-op) and
    # alpha (=E) is never applied, so the forward is exactly sign(x).
    o_ref[...] = jnp.sign(x_ref[...]).astype(o_ref.dtype)


def _ternary_kernel(x_ref, o_ref, *, inv_k):
    # W == 3: x is a (TO, Kp) tile; rows = output channels, cols = flattened (I,KH,KW)
    # zero-padded up to a multiple of 128 lanes.  inv_k = 1/true_K so padded zeros do not
    # shrink the per-channel mean.
    x = x_ref[...].astype(jnp.float32)
    absx = jnp.abs(x)
    thr = (jnp.sum(absx, axis=1, keepdims=True) * inv_k) * 0.7

    # Ternary code == sign(sign(x+thr) + sign(x-thr)).  The compare form with >= / <=
    # matches the reference exactly at |x| == thr and saves ~6 VPU ops / element.
    tern = (x >= thr).astype(jnp.float32) - (x <= -thr).astype(jnp.float32)

    # alpha = sum(|w| where |w| > thr) / count(|w| > thr), per channel.  Padded zeros
    # never satisfy |0| > thr, so num/den are unaffected by the padding.
    mask_gt = absx > thr
    num = jnp.sum(jnp.where(mask_gt, absx, 0.0), axis=1, keepdims=True)
    den = jnp.sum(mask_gt.astype(jnp.float32), axis=1, keepdims=True)
    # den == 0 -> inf -> 0*inf = nan, matching torch's unguarded 0/0.  Reciprocal runs on
    # the EUP slot, leaving the VALU free.
    alpha = num * pl.reciprocal(den, approx=False)

    o_ref[...] = (tern * alpha).astype(o_ref.dtype)


def _reference_forward(w, W):
    """Pure-JAX reference mirroring the PyTorch forward (also the tiny-tensor fallback)."""
    if W == 2:
        return jnp.sign(w)  # meancenter/clamp are no-ops; alpha unused
    elif W == 3:
        absw = jnp.abs(w)
        e = jnp.mean(absw, axis=(1, 2, 3), keepdims=True)
        thr = e * 0.7
        tern = jnp.sign(jnp.sign(w + thr) + jnp.sign(w - thr))
        mask_gt = absw > thr
        num = jnp.sum(jnp.where(mask_gt, absw, 0.0), axis=(1, 2, 3), keepdims=True)
        den = jnp.sum(mask_gt.astype(w.dtype), axis=(1, 2, 3), keepdims=True)
        return tern * (num / den)
    else:
        return w


def weight_tnn_bin_forward(w, W, *, block_rows=None, force_pallas=False):
    """Forward pass of weight_tnn_bin.

    w: conv weight, shape (O, I, KH, KW) (OIHW layout), float.
    W: bit-width config (2 = binary, 3 = ternary, otherwise identity).
    block_rows: optional override of the output-channel tile size (rounded to x8).
    force_pallas: force the Pallas path even for tiny weights (used in tests).
    """
    # TODO(synk): backward (straight-through estimator) is not implemented; forward only.
    if W != 2 and W != 3:
        return w

    O, I, KH, KW = w.shape
    K = I * KH * KW

    # Tiny weights: launch overhead dominates, use plain JAX.
    if not force_pallas and w.size * w.dtype.itemsize < _PALLAS_MIN_BYTES:
        return _reference_forward(w, W)

    x2d = w.reshape(O, K)

    # Lane-dense last dim: pad K up to a multiple of 128 so every pass uses unmasked,
    # full-vreg loads/stores.  The kernel corrects the mean with the true K.
    Kp = ((K + 127) // 128) * 128
    if Kp != K:
        x2d = jnp.pad(x2d, ((0, 0), (0, Kp - K)))

    # Row-tile size: multiple of 8 sublanes, ~1 MiB per block, whole K per block so every
    # per-channel reduction stays inside a single tile.
    if block_rows is None:
        to = (_TARGET_BLOCK_BYTES // (Kp * 4)) // 8 * 8
    else:
        to = (block_rows // 8) * 8
    to = max(8, to)
    if to >= O:
        to = O  # single row block; full-dim block shape satisfies the (8,128) rule
    grid_o = pl.cdiv(O, to)

    if W == 2:
        kernel = _binary_kernel
    else:
        kernel = functools.partial(_ternary_kernel, inv_k=1.0 / K)

    itemsize = w.dtype.itemsize
    cost = pl.CostEstimate(
        flops=12 * O * Kp,               # ~compares/selects/adds per element (advisory)
        transcendentals=0,
        bytes_accessed=2 * O * Kp * itemsize,  # read + write
    )

    out2d = pl.pallas_call(
        kernel,
        out_shape=jax.ShapeDtypeStruct((O, Kp), w.dtype),
        grid_spec=pl.GridSpec(
            grid=(grid_o,),
            in_specs=[pl.BlockSpec((to, Kp), lambda i: (i, 0))],
            out_specs=pl.BlockSpec((to, Kp), lambda i: (i, 0)),
        ),
        compiler_params=pltpu.CompilerParams(
            # Row tiles are independent -> shard across both TensorCores on v7x.
            dimension_semantics=("parallel",),
        ),
        cost_estimate=cost,
    )(x2d)

    if Kp != K:
        out2d = out2d[:, :K]
    return out2d.reshape(O, I, KH, KW)


if __name__ == "__main__":
    key = jax.random.PRNGKey(0)
    k1, k2 = jax.random.split(key)

    # Small conv weight (OIHW): 8 out-channels, 4 in-channels, 3x3 kernel.
    # Forced through the Pallas kernel to exercise the K=36 -> 128 lane padding.
    w_small = jax.random.normal(k1, (8, 4, 3, 3), dtype=jnp.float32)

    out3s = jax.block_until_ready(weight_tnn_bin_forward(w_small, 3, force_pallas=True))
    ref3s = _reference_forward(w_small, 3)
    assert out3s.shape == w_small.shape and out3s.dtype == w_small.dtype
    assert jnp.allclose(out3s, ref3s, atol=1e-5, rtol=1e-5)

    out2s = jax.block_until_ready(weight_tnn_bin_forward(w_small, 2, force_pallas=True))
    assert jnp.allclose(out2s, jnp.sign(w_small), atol=1e-6)

    # Larger conv weight: 128 out-channels, 32 in-channels, 3x3 (144 KiB) -> takes the
    # tiled Pallas path automatically; K=288 pads to 384 lanes.
    w_big = jax.random.normal(k2, (128, 32, 3, 3), dtype=jnp.float32)

    out3b = jax.block_until_ready(weight_tnn_bin_forward(w_big, 3))
    ref3b = _reference_forward(w_big, 3)
    assert out3b.shape == w_big.shape and out3b.dtype == w_big.dtype
    assert jnp.allclose(out3b, ref3b, atol=1e-5, rtol=1e-5)

    out2b = jax.block_until_ready(weight_tnn_bin_forward(w_big, 2))
    assert jnp.allclose(out2b, jnp.sign(w_big), atol=1e-6)

    # Multi-block grids over the output-channel axis (even split and partial last block).
    out3t = jax.block_until_ready(weight_tnn_bin_forward(w_big, 3, block_rows=32))
    assert jnp.allclose(out3t, ref3b, atol=1e-5, rtol=1e-5)
    out3p = jax.block_until_ready(weight_tnn_bin_forward(w_big, 3, block_rows=48))
    assert jnp.allclose(out3p, ref3b, atol=1e-5, rtol=1e-5)

    # Pass-through (W=32) path.
    out32 = jax.block_until_ready(weight_tnn_bin_forward(w_small, 32))
    assert jnp.allclose(out32, w_small)

    print("KERNEL_OK")
</pallas_src>

<mosaic_0001>
module attributes {stable_mosaic.version = 11 : i64} {
  func.func @_ternary_kernel(%arg0: i32, %arg1: memref<8x128xf32, #tpu.memory_space<vmem>>, %arg2: memref<8x128xf32, #tpu.memory_space<vmem>>) attributes {dimension_semantics = [#tpu.dimension_semantics<parallel>], iteration_bounds = array<i64: 1>, scalar_prefetch = 0 : i64, scratch_operands = 0 : i64, tpu.core_type = #tpu.core_type<tc>, window_params = [{transform_indices = @transform_0, window_bounds = array<i64: 8, 128>}, {transform_indices = @transform_1, window_bounds = array<i64: 8, 128>}]} {
    %c0 = arith.constant 0 : index
    %c0_0 = arith.constant 0 : index
    %0 = vector.load %arg1[%c0, %c0_0] : memref<8x128xf32, #tpu.memory_space<vmem>>, vector<8x128xf32>
    %1 = math.absf %0 : vector<8x128xf32>
    %cst = arith.constant dense<0.000000e+00> : vector<8xf32>
    %2 = vector.multi_reduction <add>, %1, %cst [1] : vector<8x128xf32> to vector<8xf32>
    %3 = vector.shape_cast %2 : vector<8xf32> to vector<8x1xf32>
    %cst_1 = arith.constant 0.027777778 : f32
    %4 = vector.broadcast %cst_1 : f32 to vector<8x1xf32>
    %5 = arith.mulf %3, %4 : vector<8x1xf32>
    %cst_2 = arith.constant 0.699999988 : f32
    %6 = vector.broadcast %cst_2 : f32 to vector<8x1xf32>
    %7 = arith.mulf %5, %6 : vector<8x1xf32>
    %8 = vector.broadcast %7 : vector<8x1xf32> to vector<8x128xf32>
    %9 = arith.cmpf oge, %0, %8 : vector<8x128xf32>
    %10 = arith.extui %9 : vector<8x128xi1> to vector<8x128xi32>
    %11 = arith.sitofp %10 : vector<8x128xi32> to vector<8x128xf32>
    %cst_3 = arith.constant 0.000000e+00 : f32
    %12 = vector.broadcast %cst_3 : f32 to vector<8x1xf32>
    %13 = arith.subf %12, %7 : vector<8x1xf32>
    %14 = vector.broadcast %13 : vector<8x1xf32> to vector<8x128xf32>
    %15 = arith.cmpf ole, %0, %14 : vector<8x128xf32>
    %16 = arith.extui %15 : vector<8x128xi1> to vector<8x128xi32>
    %17 = arith.sitofp %16 : vector<8x128xi32> to vector<8x128xf32>
    %18 = arith.subf %11, %17 : vector<8x128xf32>
    %19 = vector.broadcast %7 : vector<8x1xf32> to vector<8x128xf32>
    %20 = arith.cmpf ogt, %1, %19 : vector<8x128xf32>
    %cst_4 = arith.constant 0.000000e+00 : f32
    %21 = vector.broadcast %cst_4 : f32 to vector<8x128xf32>
    %22 = arith.select %20, %1, %21 : vector<8x128xi1>, vector<8x128xf32>
    %cst_5 = arith.constant dense<0.000000e+00> : vector<8xf32>
    %23 = vector.multi_reduction <add>, %22, %cst_5 [1] : vector<8x128xf32> to vector<8xf32>
    %24 = vector.shape_cast %23 : vector<8xf32> to vector<8x1xf32>
    %25 = arith.extui %20 : vector<8x128xi1> to vector<8x128xi32>
    %26 = arith.sitofp %25 : vector<8x128xi32> to vector<8x128xf32>
    %cst_6 = arith.constant dense<0.000000e+00> : vector<8xf32>
    %27 = vector.multi_reduction <add>, %26, %cst_6 [1] : vector<8x128xf32> to vector<8xf32>
    %28 = vector.shape_cast %27 : vector<8xf32> to vector<8x1xf32>
    %29 = tpu.reciprocal %28 : vector<8x1xf32> -> vector<8x1xf32>
    %30 = arith.mulf %24, %29 : vector<8x1xf32>
    %31 = vector.broadcast %30 : vector<8x1xf32> to vector<8x128xf32>
    %32 = arith.mulf %18, %31 : vector<8x128xf32>
    %c0_7 = arith.constant 0 : index
    %c0_8 = arith.constant 0 : index
    %33 = vector.load %arg2[%c0_7, %c0_8] : memref<8x128xf32, #tpu.memory_space<vmem>>, vector<8x128xf32>
    tpu.vector_store %arg2[%c0_7, %c0_8], %32 {strides = array<i32>} : memref<8x128xf32, #tpu.memory_space<vmem>>, vector<8x128xf32>,
    return
  }
  func.func @transform_0(%arg0: i32) -> (i32, i32) {
    %c0_i32 = arith.constant 0 : i32
    %c0_i32_0 = arith.constant 0 : i32
    return %arg0, %c0_i32 : i32, i32
  }
  func.func @transform_1(%arg0: i32) -> (i32, i32) {
    %c0_i32 = arith.constant 0 : i32
    %c0_i32_0 = arith.constant 0 : i32
    return %arg0, %c0_i32 : i32, i32
  }
}

</mosaic_0001>

<llo_original>
// kernel: tpu_custom_call.1
$region0: #{tpu_custom_call.1}
  #allocation0 [shape = 'u32[]', space=smem, size = 0x4, offset = 0x4, fixed_abs, tag = 'smem constant byte address 0x4 - core index']
  #allocation1 [shape = 'u32[144,128]{1,0:T(1,128)}', space=vmem, size = 0x12000, scoped, tag = 'internal scratch']
  %s0 = inlined_call_operand.hbm [shape: f32[8,128], index: 0, kind: input, shape index: {}]
  %s1 = inlined_call_operand.hbm [shape: f32[8,128], index: 1, kind: output, shape index: {}]
  %s2 = sld [smem:[#allocation0]]
  $region18: #{tpu_custom_call.1} parent=0
    _
  %s4 = ssub.s32 1, %s2
  %s5 = scalar_select 0, %s4, %s2
  $region1: #{tpu_custom_call.1} parent=0
    #allocation2 [shape = 'u8[4096]{0}', space=vmem, size = 0x1000, scoped, tag = 'input window, operand 0, single buffered']
    #allocation3 [shape = 's32[1]{0}', space=sflag, size = 0x4, scoped, tag = 'scoped memory for tpu_custom_call.1']
    #allocation4 [shape = 's32[1]{0}', space=sflag, size = 0x4, scoped, tag = 'scoped memory for tpu_custom_call.1']
    #allocation5 [shape = 'u8[4096]{0}', space=vmem, size = 0x1000, scoped, tag = 'output window, operand 0, single buffered']
    %6 = vsyncpa [#allocation3], 0
    %7 = vsyncpa [#allocation4], 0
    // Predicated region
    $region2: #{tpu_custom_call.1} parent=1 // pred_check
      _
    $region3: #{tpu_custom_call.1} parent=1 // pred_check_branch
      %9 = sbr.rel (0) target = $region5
    $region4: #{tpu_custom_call.1} parent=1 // pred_region
      %s11 = ssub.s32 128, 128
      %12 = vsyncadd [#allocation3], %s11
      %s14 = sshll.u32 [#allocation2], 4
      %s15 = int_to_ptr.vmem [resolvable:$true] %s14
      %17 = dma.hbm_to_vmem [thread:$0]  %s0, 128, %s15, [#allocation3]
    $region5: #{tpu_custom_call.1} parent=1 // pred_fallthru
      _
    // Predicated region
    $region6: #{tpu_custom_call.1} parent=1 // pred_check
      _
    $region7: #{tpu_custom_call.1} parent=1 // pred_check_branch
      %19 = sbr.rel (0) target = $region9
    $region8: #{tpu_custom_call.1} parent=1 // pred_region
      %20 = dma.done [#allocation3], 128
    $region9: #{tpu_custom_call.1} parent=1 // pred_fallthru
      _
    %v21 = vld [vmem:[#allocation2] sm:$0xff]
    %v22 = vand.u32 2147483647, %v21
    %23 = vadd.xlane.f32.xlu0 %v22
    %v24 = vpop.xlane.xlu0 %23
    %v25 = vmul.f32 %v24, 0.027777778
    %v26 = vmul.f32 %v25, 0.7
    %vm27 = vcmp.ge.f32.partialorder %v21, %v26
    %v28 = vsel %vm27, 1, 0
    %v29 = vcvt.s32.f32 %v28
    %v30 = vsub.f32 0.0, %v26
    %vm31 = vcmp.le.f32.partialorder %v21, %v30
    %v32 = vsel %vm31, 1, 0
    %v33 = vcvt.s32.f32 %v32
    %v34 = vsub.f32 %v29, %v33
    %vm35 = vcmp.gt.f32.partialorder %v22, %v26
    %v36 = vsel %vm35, %v22, 0.0
    %37 = vadd.xlane.f32.xlu0 %v36
    %v38 = vpop.xlane.xlu0 %37
    %v39 = vsel %vm35, 1, 0
    %v40 = vcvt.s32.f32 %v39
    %41 = vadd.xlane.f32.xlu0 %v40
    %v42 = vpop.xlane.xlu0 %41
    %v43 = vrcp.pop %v42
    %v44 = vmul.f32 %v38, %v43
    %v45 = vmul.f32 %v34, %v44
    %46 = vst [vmem:[#allocation5] sm:$0xff] %v45
    // Predicated region
    $region10: #{tpu_custom_call.1} parent=1 // pred_check
      _
    $region11: #{tpu_custom_call.1} parent=1 // pred_check_branch
      %48 = sbr.rel (0) target = $region13
    $region12: #{tpu_custom_call.1} parent=1 // pred_region
      %s50 = ssub.s32 128, 128
      %51 = vsyncadd [#allocation4], %s50
      %s53 = sshll.u32 [#allocation5], 4
      %s54 = int_to_ptr.vmem [resolvable:$true] %s53
      %56 = dma.vmem_to_hbm [thread:$0]  %s54, 128, %s1, [#allocation4]
    $region13: #{tpu_custom_call.1} parent=1 // pred_fallthru
      _
    // Predicated region
    $region14: #{tpu_custom_call.1} parent=1 // pred_check
      _
    $region15: #{tpu_custom_call.1} parent=1 // pred_check_branch
      %58 = sbr.rel (0) target = $region17
    $region16: #{tpu_custom_call.1} parent=1 // pred_region
      %59 = dma.done [#allocation4], 128
    $region17: #{tpu_custom_call.1} parent=1 // pred_fallthru
      _
    %60 = vsyncpa [#allocation3], 1
    %61 = vsyncpa [#allocation4], 1

</llo_original>
